<compile_context>
chip_gen: v7x
topology: tpu7x:2x2x1
jax: 0.10.0
libtpu: 0.0.40
codegen_flags: <defaults>
</compile_context>

<pallas_src>
import jax
import jax.numpy as jnp
from jax.experimental import pallas as pl
from jax.experimental.pallas import tpu as pltpu


def _tanh_sim_kernel(x_ref, o_ref):
    # Elementwise hot path: tanh on the EUP (forced f32 so it also works on
    # v5e), scale-by-5 on the VPU, cast back to the I/O dtype for the store.
    x = x_ref[...]
    y = jnp.tanh(x.astype(jnp.float32)) * 5.0
    o_ref[...] = y.astype(o_ref.dtype)


def custom_tanh_sim(x: jax.Array,
                    *,
                    target_block_bytes: int = 2 << 20,
                    donate: bool = False) -> jax.Array:
    """Applies y = tanh(x) * 5 elementwise via a Pallas TPU kernel.

    Works for any shape / float dtype.  HBM traffic is exactly one read and
    one write of the tensor whenever x.size is a multiple of 128 (the lane
    width is chosen adaptively from {1024, 512, 256, 128}).
    """
    orig_shape = x.shape
    dtype = x.dtype
    itemsize = jnp.dtype(dtype).itemsize

    flat = x.reshape(-1)                  # metadata-only for contiguous input
    n = flat.shape[0]

    # Pick the widest lane count that divides n (avoids the pad/slice path for
    # anything that is a multiple of 128 elements).  Fall back to 128 + pad.
    lanes = 128
    for cand in (1024, 512, 256, 128):
        if n % cand == 0:
            lanes = cand
            break

    pad = (-n) % lanes
    if pad:
        # TODO(synk): ragged (non-multiple-of-128) sizes pay one extra HBM pass
        # for the pad + slice; a tiny side kernel for the tail would remove it.
        flat = jnp.pad(flat, (0, pad))
    rows = (n + pad) // lanes
    slab = flat.reshape(rows, lanes)

    # Minimum sublane tile: 8 for 32-bit, 16 for 16-bit, 32 for 8-bit dtypes.
    sub_min = 8 * max(1, 4 // itemsize)

    # ~2 MiB per block: DMA time per grid step comfortably exceeds the
    # ~0.35 us per-step overhead, while 4x(block) of double-buffered VMEM is
    # far below every chip's scoped VMEM limit.
    tile_rows = max(sub_min, target_block_bytes // (lanes * itemsize))
    tile_rows = (tile_rows // sub_min) * sub_min

    if rows <= tile_rows:
        tile_rows = rows          # block row-dim == full array dim: always legal
    num_blocks = pl.cdiv(rows, tile_rows)

    # Keep >=2 programs on the parallel axis when there is enough work so the
    # grid can be sharded across v7x's two TensorCores (megacore).
    if num_blocks == 1 and rows >= 2 * sub_min:
        half = -(-rows // 2)                        # ceil(rows / 2)
        tile_rows = -(-half // sub_min) * sub_min   # round up to sub_min multiple
        num_blocks = pl.cdiv(rows, tile_rows)

    out = pl.pallas_call(
        _tanh_sim_kernel,
        out_shape=jax.ShapeDtypeStruct((rows, lanes), dtype),
        grid_spec=pltpu.PrefetchScalarGridSpec(
            num_scalar_prefetch=0,
            grid=(num_blocks,),
            in_specs=[pl.BlockSpec((tile_rows, lanes), lambda i: (i, 0))],
            out_specs=pl.BlockSpec((tile_rows, lanes), lambda i: (i, 0)),
        ),
        compiler_params=pltpu.CompilerParams(
            dimension_semantics=("parallel",),
            vmem_limit_bytes=32 << 20,
        ),
        # Elementwise, same shape/dtype: allow in-place when caller donates x.
        input_output_aliases=({0: 0} if donate else {}),
    )(slab)

    if pad:
        return out.reshape(-1)[:n].reshape(orig_shape)
    return out.reshape(orig_shape)


if __name__ == "__main__":
    key = jax.random.PRNGKey(0)
    k0, k1, k2 = jax.random.split(key, 3)

    # Primary case (NCHW-style, as the module is used): no pad, no slice path.
    x = jax.random.normal(k0, (2, 4, 16, 16), dtype=jnp.float32)
    y = jax.block_until_ready(custom_tanh_sim(x))
    y_ref = jnp.tanh(x) * 5.0
    assert y.shape == x.shape and y.dtype == x.dtype
    assert jnp.allclose(y, y_ref, atol=1e-5, rtol=1e-5)

    # Ragged size: exercises the (rare) pad + slice fallback path.
    x_rag = jax.random.normal(k1, (3, 5, 7), dtype=jnp.float32)
    y_rag = jax.block_until_ready(custom_tanh_sim(x_rag))
    assert y_rag.shape == x_rag.shape
    assert jnp.allclose(y_rag, jnp.tanh(x_rag) * 5.0, atol=1e-5, rtol=1e-5)

    # bf16 I/O (halves HBM bytes); kernel computes tanh in f32 internally.
    x_bf = jax.random.normal(k2, (2, 4, 16, 16), dtype=jnp.bfloat16)
    y_bf = jax.block_until_ready(custom_tanh_sim(x_bf))
    y_bf_ref = jnp.tanh(x_bf.astype(jnp.float32)) * 5.0
    assert y_bf.dtype == jnp.bfloat16 and y_bf.shape == x_bf.shape
    assert jnp.allclose(y_bf.astype(jnp.float32), y_bf_ref, atol=5e-2, rtol=5e-2)

    print("KERNEL_OK")
</pallas_src>

<mosaic_0001>
module attributes {stable_mosaic.version = 11 : i64} {
  func.func @_tanh_sim_kernel(%arg0: i32, %arg1: memref<2x1024xf32, #tpu.memory_space<vmem>>, %arg2: memref<2x1024xf32, #tpu.memory_space<vmem>>) attributes {dimension_semantics = [#tpu.dimension_semantics<parallel>], iteration_bounds = array<i64: 1>, scalar_prefetch = 0 : i64, scratch_operands = 0 : i64, tpu.core_type = #tpu.core_type<tc>, window_params = [{transform_indices = @transform_0, window_bounds = array<i64: 2, 1024>}, {transform_indices = @transform_1, window_bounds = array<i64: 2, 1024>}]} {
    %c0 = arith.constant 0 : index
    %c0_0 = arith.constant 0 : index
    %0 = vector.load %arg1[%c0, %c0_0] : memref<2x1024xf32, #tpu.memory_space<vmem>>, vector<2x1024xf32>
    %1 = math.tanh %0 : vector<2x1024xf32>
    %cst = arith.constant 5.000000e+00 : f32
    %2 = vector.broadcast %cst : f32 to vector<2x1024xf32>
    %3 = arith.mulf %1, %2 : vector<2x1024xf32>
    %c0_1 = arith.constant 0 : index
    %c0_2 = arith.constant 0 : index
    %4 = vector.load %arg2[%c0_1, %c0_2] : memref<2x1024xf32, #tpu.memory_space<vmem>>, vector<2x1024xf32>
    tpu.vector_store %arg2[%c0_1, %c0_2], %3 {strides = array<i32>} : memref<2x1024xf32, #tpu.memory_space<vmem>>, vector<2x1024xf32>,
    return
  }
  func.func @transform_0(%arg0: i32) -> (i32, i32) {
    %c0_i32 = arith.constant 0 : i32
    %c0_i32_0 = arith.constant 0 : i32
    return %arg0, %c0_i32 : i32, i32
  }
  func.func @transform_1(%arg0: i32) -> (i32, i32) {
    %c0_i32 = arith.constant 0 : i32
    %c0_i32_0 = arith.constant 0 : i32
    return %arg0, %c0_i32 : i32, i32
  }
}

</mosaic_0001>

<llo_original>
// kernel: tpu_custom_call.1
$region0: #{tpu_custom_call.1}
  #allocation0 [shape = 'u32[]', space=smem, size = 0x4, offset = 0x4, fixed_abs, tag = 'smem constant byte address 0x4 - core index']
  #allocation1 [shape = 'u32[144,128]{1,0:T(1,128)}', space=vmem, size = 0x12000, scoped, tag = 'internal scratch']
  %s0 = inlined_call_operand.hbm [shape: f32[2,1024], index: 0, kind: input, shape index: {}]
  %s1 = inlined_call_operand.hbm [shape: f32[2,1024], index: 1, kind: output, shape index: {}]
  %s2 = sld [smem:[#allocation0]]
  $region18: #{tpu_custom_call.1} parent=0
    _
  %s4 = ssub.s32 1, %s2
  %s5 = scalar_select 0, %s4, %s2
  $region1: #{tpu_custom_call.1} parent=0
    #allocation2 [shape = 'u8[8192]{0}', space=vmem, size = 0x2000, scoped, tag = 'input window, operand 0, single buffered']
    #allocation3 [shape = 's32[1]{0}', space=sflag, size = 0x4, scoped, tag = 'scoped memory for tpu_custom_call.1']
    #allocation4 [shape = 's32[1]{0}', space=sflag, size = 0x4, scoped, tag = 'scoped memory for tpu_custom_call.1']
    #allocation5 [shape = 'u8[8192]{0}', space=vmem, size = 0x2000, scoped, tag = 'output window, operand 0, single buffered']
    %6 = vsyncpa [#allocation3], 0
    %7 = vsyncpa [#allocation4], 0
    // Predicated region
    $region2: #{tpu_custom_call.1} parent=1 // pred_check
      _
    $region3: #{tpu_custom_call.1} parent=1 // pred_check_branch
      %9 = sbr.rel (0) target = $region5
    $region4: #{tpu_custom_call.1} parent=1 // pred_region
      %s11 = ssub.s32 256, 256
      %12 = vsyncadd [#allocation3], %s11
      %s14 = sshll.u32 [#allocation2], 4
      %s15 = int_to_ptr.vmem [resolvable:$true] %s14
      %17 = dma.hbm_to_vmem [thread:$0]  %s0, 256, %s15, [#allocation3]
    $region5: #{tpu_custom_call.1} parent=1 // pred_fallthru
      _
    // Predicated region
    $region6: #{tpu_custom_call.1} parent=1 // pred_check
      _
    $region7: #{tpu_custom_call.1} parent=1 // pred_check_branch
      %19 = sbr.rel (0) target = $region9
    $region8: #{tpu_custom_call.1} parent=1 // pred_region
      %20 = dma.done [#allocation3], 256
    $region9: #{tpu_custom_call.1} parent=1 // pred_fallthru
      _
    %v21 = vld [vmem:[#allocation2] sm:$0xff]
    %v22 = vld [vmem:[#allocation2 + $0x8] sm:$0xff]
    %v23 = vtanh.pop %v21
    %v24 = vtanh.pop %v22
    %v25 = vmul.f32 %v23, 5.0
    %v26 = vmul.f32 %v24, 5.0
    %27 = vst [vmem:[#allocation5] sm:$0xff] %v25
    %28 = vst [vmem:[#allocation5 + $0x8] sm:$0xff] %v26
    // Predicated region
    $region10: #{tpu_custom_call.1} parent=1 // pred_check
      _
    $region11: #{tpu_custom_call.1} parent=1 // pred_check_branch
      %30 = sbr.rel (0) target = $region13
    $region12: #{tpu_custom_call.1} parent=1 // pred_region
      %s32 = ssub.s32 256, 256
      %33 = vsyncadd [#allocation4], %s32
      %s35 = sshll.u32 [#allocation5], 4
      %s36 = int_to_ptr.vmem [resolvable:$true] %s35
      %38 = dma.vmem_to_hbm [thread:$0]  %s36, 256, %s1, [#allocation4]
    $region13: #{tpu_custom_call.1} parent=1 // pred_fallthru
      _
    // Predicated region
    $region14: #{tpu_custom_call.1} parent=1 // pred_check
      _
    $region15: #{tpu_custom_call.1} parent=1 // pred_check_branch
      %40 = sbr.rel (0) target = $region17
    $region16: #{tpu_custom_call.1} parent=1 // pred_region
      %41 = dma.done [#allocation4], 256
    $region17: #{tpu_custom_call.1} parent=1 // pred_fallthru
      _
    %42 = vsyncpa [#allocation3], 1
    %43 = vsyncpa [#allocation4], 1

</llo_original>
